<compile_context>
chip_gen: v6e
topology: v6e:2x2x1
jax: 0.10.0
libtpu: 0.0.40
codegen_flags: <defaults>
</compile_context>

<pallas_src>
import jax
import jax.numpy as jnp
from jax.experimental import pallas as pl
from jax.experimental.pallas import tpu as pltpu


def _avg_fps_kernel(meta_in_ref, fps_out_ref):
    """All refs live in SMEM.

    meta_in_ref : f32[2]  [total_frames, duration_seconds]
    fps_out_ref : f32[1]  [avg_fps]  (total_frames / duration, guarded)
    """
    total_frames = meta_in_ref[0]
    duration_s = meta_in_ref[1]
    safe_dur = jnp.where(duration_s > 0.0, duration_s, jnp.float32(1.0))
    fps = total_frames / safe_dur
    fps_out_ref[0] = jnp.where(duration_s > 0.0, fps, jnp.float32(0.0))


@jax.jit
def _device_avg_fps(total_frames_f32, duration_f32):
    """Device-side avg_fps for the case where duration only exists on device."""
    meta_in = jnp.stack(
        [total_frames_f32.astype(jnp.float32), duration_f32.astype(jnp.float32)]
    )
    fps = pl.pallas_call(
        _avg_fps_kernel,
        out_shape=jax.ShapeDtypeStruct((1,), jnp.float32),
        in_specs=[pl.BlockSpec(memory_space=pltpu.MemorySpace.SMEM)],
        out_specs=pl.BlockSpec(memory_space=pltpu.MemorySpace.SMEM),
    )(meta_in)
    return fps[0]


def video_reader_init(frames: jax.Array, duration_s) -> dict:
    """Pallas-backed equivalent of VideoReaderInit.forward.

    frames     : decoded video frames (leading dim = T frames).  Stands in for
                 the decord.VideoReader handle; returned unchanged (zero copy).
    duration_s : video duration in seconds.  Host float -> metadata is computed
                 entirely on host (no device work).  Device scalar -> avg_fps is
                 computed by the tiny jitted SMEM kernel and stays on device.
    """
    # meta.total_frames = len(container): static, never touches the device.
    total_frames = int(frames.shape[0])

    if isinstance(duration_s, (int, float)):
        # Host path: no kernel, no dispatch, no H2D/D2H traffic.
        avg_fps = float(total_frames) / float(duration_s) if duration_s > 0 else 0.0
    else:
        # Device path: duration only exists as a device scalar; fuse the divide
        # into one cached jitted launch and keep the result as a device scalar
        # (no blocking host round-trip here).
        avg_fps = _device_avg_fps(
            jnp.float32(total_frames),
            jnp.asarray(duration_s, dtype=jnp.float32).reshape(()),
        )

    return {
        # video_reader: semantically unchanged by this module -> hand the input
        # back directly (no identity copy).
        "video_reader": frames,
        "total_frames": total_frames,
        "avg_fps": avg_fps,
    }


if __name__ == "__main__":
    key = jax.random.PRNGKey(0)
    # Synthetic "decoded video": T=8 frames, H=16 rows, W*C=128 lane-flattened.
    T, H, WC = 8, 16, 128
    frames = jax.random.normal(key, (T, H, WC), dtype=jnp.float32)
    duration_host = 0.25  # 8 frames over 0.25 s -> avg_fps = 32.0

    # Host-scalar path (preferred: zero device work).
    meta_host = video_reader_init(frames, duration_host)
    assert meta_host["total_frames"] == T
    assert abs(meta_host["avg_fps"] - T / duration_host) < 1e-6
    assert meta_host["video_reader"] is frames

    # Device-scalar path (exercises the Pallas kernel once).
    duration_dev = jnp.asarray(duration_host, dtype=jnp.float32)
    meta_dev = video_reader_init(frames, duration_dev)
    jax.block_until_ready(meta_dev["video_reader"])
    fps_dev = jax.block_until_ready(meta_dev["avg_fps"])

    assert meta_dev["total_frames"] == T
    assert abs(float(fps_dev) - T / duration_host) < 1e-4
    assert jnp.allclose(meta_dev["video_reader"], frames)

    print("KERNEL_OK")
</pallas_src>

<mosaic_0001>
module attributes {stable_mosaic.version = 11 : i64} {
  func.func @_avg_fps_kernel(%arg0: memref<2xf32, #tpu.memory_space<smem>>, %arg1: memref<1xf32, #tpu.memory_space<smem>>) attributes {dimension_semantics = [], scalar_prefetch = 0 : i64, scratch_operands = 0 : i64, tpu.core_type = #tpu.core_type<tc>} {
    %c0 = arith.constant 0 : index
    %0 = memref.load %arg0[%c0] : memref<2xf32, #tpu.memory_space<smem>>
    %c1 = arith.constant 1 : index
    %1 = memref.load %arg0[%c1] : memref<2xf32, #tpu.memory_space<smem>>
    %cst = arith.constant 0.000000e+00 : f32
    %2 = arith.cmpf ogt, %1, %cst : f32
    %cst_0 = arith.constant 1.000000e+00 : f32
    %3 = arith.select %2, %1, %cst_0 : f32
    %4 = arith.divf %0, %3 : f32
    %cst_1 = arith.constant 0.000000e+00 : f32
    %5 = arith.cmpf ogt, %1, %cst_1 : f32
    %cst_2 = arith.constant 0.000000e+00 : f32
    %6 = arith.select %5, %4, %cst_2 : f32
    %c0_3 = arith.constant 0 : index
    %7 = memref.load %arg1[%c0_3] : memref<1xf32, #tpu.memory_space<smem>>
    memref.store %6, %arg1[%c0_3] : memref<1xf32, #tpu.memory_space<smem>>
    return
  }
}

</mosaic_0001>

<llo_original>
// kernel: _device_avg_fps.1
$region0: #{_device_avg_fps.1}
  #allocation0 [shape = 'u32[]', space=smem, size = 0x4, offset = 0x4, fixed_abs, tag = 'smem constant byte address 0x4 - core index']
  #allocation1 [shape = 'u32[144,128]{1,0:T(1,128)}', space=vmem, size = 0x12000, scoped, tag = 'internal scratch']
  %s0 = inlined_call_operand.vmem [shape: f32[2], index: 0, kind: input, shape index: {}]
  %s1 = inlined_call_operand.hbm [shape: f32[1], index: 1, kind: output, shape index: {}]
  %s2 = sld [smem:[#allocation0]]
  $region18: #{_device_avg_fps.1} parent=0
    _
  %s4 = ssub.s32 1, %s2
  %s5 = scalar_select 0, %s4, %s2
  $region1: #{_device_avg_fps.1} parent=0
    #allocation2 [shape = 'u8[512]{0}', space=smem, size = 0x200, scoped, tag = 'input window, operand 0, single buffered']
    #allocation3 [shape = 's32[1]{0}', space=sflag, size = 0x4, scoped, tag = 'scoped memory for _device_avg_fps.1']
    #allocation4 [shape = 's32[1]{0}', space=sflag, size = 0x4, scoped, tag = 'scoped memory for _device_avg_fps.1']
    #allocation5 [shape = 'u8[512]{0}', space=smem, size = 0x200, scoped, tag = 'output window, operand 0, single buffered']
    %6 = vsyncpa [#allocation4], 0
    %7 = vsyncpa [#allocation3], 0
    // Predicated region
    $region2: #{_device_avg_fps.1} parent=1 // pred_check
      _
    $region3: #{_device_avg_fps.1} parent=1 // pred_check_branch
      %9 = sbr.rel (0) target = $region5
    $region4: #{_device_avg_fps.1} parent=1 // pred_region
      %s11 = ssub.s32 16, 16
      %12 = vsyncadd [#allocation4], %s11
      %s14 = sshll.u32 %s0, 4
      %s15 = int_to_ptr.vmem [resolvable:$true] %s14
      %17 = dma.vmem_to_smem %s15, 16, [#allocation2], [#allocation4]
    $region5: #{_device_avg_fps.1} parent=1 // pred_fallthru
      _
    // Predicated region
    $region6: #{_device_avg_fps.1} parent=1 // pred_check
      _
    $region7: #{_device_avg_fps.1} parent=1 // pred_check_branch
      %19 = sbr.rel (0) target = $region9
    $region8: #{_device_avg_fps.1} parent=1 // pred_region
      %20 = dma.done [#allocation4], 16
    $region9: #{_device_avg_fps.1} parent=1 // pred_fallthru
      _
    %21 = sfence
    %s22 = sld [smem:[#allocation2]]
    %s23 = sld [smem:[#allocation2 + $0x1]]
    %p24 = scmp.gt.f32.partialorder %s23, 0.0
    %s25 = scalar_select %p24, %s23, 1.0
    %v26 = vstv %s25
    %v27 = vrcp.pop %v26
    %s28 = vtos %v27
    %s29 = smul.f32 %s22, %s28
    %s30 = scalar_select %p24, %s29, 0.0
    %s31 = scalar_lea.smem [#allocation5], 0
    %32 = sst [smem:[%s31]] %s30
    // Predicated region
    $region10: #{_device_avg_fps.1} parent=1 // pred_check
      _
    $region11: #{_device_avg_fps.1} parent=1 // pred_check_branch
      %34 = sbr.rel (0) target = $region13
    $region12: #{_device_avg_fps.1} parent=1 // pred_region
      %s36 = ssub.s32 16, 16
      %37 = vsyncadd [#allocation3], %s36
      %40 = dma.smem_to_hbm [#allocation5], 16, %s1, [#allocation3]
    $region13: #{_device_avg_fps.1} parent=1 // pred_fallthru
      _
    // Predicated region
    $region14: #{_device_avg_fps.1} parent=1 // pred_check
      _
    $region15: #{_device_avg_fps.1} parent=1 // pred_check_branch
      %42 = sbr.rel (0) target = $region17
    $region16: #{_device_avg_fps.1} parent=1 // pred_region
      %43 = dma.done [#allocation3], 16
    $region17: #{_device_avg_fps.1} parent=1 // pred_fallthru
      _
    %44 = sfence
    %45 = vsyncpa [#allocation3], 1
    %46 = vsyncpa [#allocation4], 1

</llo_original>
